<compile_context>
chip_gen: v6e
topology: v6e:2x2x1
jax: 0.10.0
libtpu: 0.0.40
codegen_flags: <defaults>
</compile_context>

<pallas_src>
import jax
import jax.numpy as jnp
from jax.experimental import pallas as pl
from jax.experimental.pallas import tpu as pltpu

F = 13      # input features
H = 8       # hidden width
G = 8       # batch rows packed per VMEM row: 8 * 13 = 104 lanes (~one 128-lane tile)
TBR = 4096  # packed rows per grid step => 32768 batch elements / step.
            # VMEM: x tile (4096,104)->lane-padded (4096,128) f32 = 2 MiB, out tile 2 MiB,
            # double-buffered + params => ~8.2 MiB total (safe on v5e/v6e/v7x defaults).


def _round_up(n: int, m: int) -> int:
    return ((n + m - 1) // m) * m


def mlp_kernel(x_ref, p1_ref, p2_ref, o_ref):
    # x : (tbr, G*F)      row r = batch rows 8r..8r+7 of the original [B, 13] input
    # p1: (G*F+1, G*H)    rows 0..103: block-diag of 8 copies of w1.T; row 104: b1 tiled
    # p2: (G*H+1, G)      rows 0..63 : block-diag of 8 copies of w2 column; row 64: b2
    # o : (tbr, G)        column p = output for batch row 8r + p
    x = x_ref[...]
    w1 = p1_ref[0:G * F, :]              # (104, 64)
    b1 = p1_ref[G * F:G * F + 1, :]      # (1, 64)
    w2 = p2_ref[0:G * H, :]              # (64, 8)
    b2 = p2_ref[G * H:G * H + 1, :]      # (1, 8)

    # Layer 1 for all 8 packed batch positions in one MXU matmul (K=104, N=64).
    # The zero blocks of the block-diagonal weights contribute exactly 0, so the
    # numerics match a plain 13-long dot per batch row.
    h = jnp.dot(x, w1, preferred_element_type=jnp.float32) + b1
    h = jnp.maximum(h, 0.0)              # ReLU (VPU)
    # Layer 2 (block-diag, K=64, N=8) + bias.
    o_ref[...] = jnp.dot(h, w2, preferred_element_type=jnp.float32) + b2


def _pack_params(w1, b1, w2, b2):
    """Pack the tiny MLP params into two grid-resident blocks of 'grouped' weights."""
    w1_blk = jnp.kron(jnp.eye(G, dtype=w1.dtype), w1.T)                 # (G*F, G*H)
    p1 = jnp.concatenate([w1_blk, jnp.tile(b1.reshape(1, H), (1, G))], axis=0)
    w2_blk = jnp.kron(jnp.eye(G, dtype=w2.dtype), w2.reshape(H, 1))     # (G*H, G)
    p2 = jnp.concatenate([w2_blk, jnp.full((1, G), b2[0], dtype=w2.dtype)], axis=0)
    return p1, p2


@jax.jit
def mlp_forward(x, w1, b1, w2, b2):
    """x: [B, 13] (or [13]); w1: [8, 13]; b1: [8]; w2: [1, 8]; b2: [1] -> torch.squeeze(y)."""
    if x.ndim == 1:                      # nn.Linear also accepts an unbatched vector
        x = x[None, :]
    B, f = x.shape
    assert f == F and w1.shape == (H, F) and w2.shape == (1, H)

    p1, p2 = _pack_params(w1, b1, w2, b2)

    # Pad the batch to a multiple of G.  This copies x ONLY when B % 8 != 0 (rare);
    # the common case streams the original array with zero extra HBM passes.
    Bp = _round_up(B, G)
    if Bp != B:
        x = jnp.pad(x, ((0, Bp - B), (0, 0)))
    R = Bp // G
    # Free row-major re-interpretation under jit: row r holds batch rows 8r..8r+7.
    xg = x.reshape(R, G * F)

    # Tile the packed-row axis.  Keep >= 2 grid steps once R is non-trivial so the
    # "parallel" axis can use both TensorCores on v7x.
    if R <= 64:
        tbr = R
    else:
        tbr = min(TBR, _round_up(pl.cdiv(R, 2), 8))
    grid = (pl.cdiv(R, tbr),)            # ragged tail block is masked by Pallas

    out = pl.pallas_call(
        mlp_kernel,
        out_shape=jax.ShapeDtypeStruct((R, G), jnp.float32),
        grid=grid,
        in_specs=[
            pl.BlockSpec((tbr, G * F), lambda i: (i, 0)),        # x, pipelined over batch
            pl.BlockSpec((G * F + 1, G * H), lambda i: (0, 0)),  # packed layer-1 params (resident)
            pl.BlockSpec((G * H + 1, G), lambda i: (0, 0)),      # packed layer-2 params (resident)
        ],
        out_specs=pl.BlockSpec((tbr, G), lambda i: (i, 0)),
        compiler_params=pltpu.CompilerParams(
            dimension_semantics=("parallel",)),                  # shards batch tiles over v7x TCs
        cost_estimate=pl.CostEstimate(
            flops=2 * Bp * (F * H + H),
            transcendentals=0,
            bytes_accessed=4 * (Bp * F + Bp) + 4 * (p1.size + p2.size)),
    )(xg, p1, p2)

    y = out.reshape(Bp)[:B]              # flat[8r + p] == batch row 8r + p
    # torch.squeeze removes ALL size-1 dims: (B,) for B > 1, 0-d scalar for B == 1.
    return jnp.squeeze(y)


if __name__ == "__main__":
    key = jax.random.PRNGKey(0)
    kx, k1, k2, k3, k4, kx2 = jax.random.split(key, 6)

    # Mirror nn.Linear's uniform(-1/sqrt(fan_in), 1/sqrt(fan_in)) init (torch shapes).
    bound1 = 1.0 / (F ** 0.5)
    bound2 = 1.0 / (H ** 0.5)
    w1 = jax.random.uniform(k1, (H, F), jnp.float32, -bound1, bound1)
    b1 = jax.random.uniform(k2, (H,), jnp.float32, -bound1, bound1)
    w2 = jax.random.uniform(k3, (1, H), jnp.float32, -bound2, bound2)
    b2 = jax.random.uniform(k4, (1,), jnp.float32, -bound2, bound2)

    def reference(xx):
        h = jnp.maximum(xx @ w1.T + b1, 0.0)
        return jnp.squeeze(h @ w2.T + b2)

    # Small batch (module's typical usage).
    B = 8
    x = jax.random.normal(kx, (B, F), dtype=jnp.float32)
    out = jax.block_until_ready(mlp_forward(x, w1, b1, w2, b2))
    assert out.shape == (B,), out.shape
    assert jnp.allclose(out, reference(x), atol=1e-5, rtol=1e-5)

    # Multi-tile grid + non-multiple-of-8 batch (exercises the masked tail block).
    B2 = 1037
    x2 = jax.random.normal(kx2, (B2, F), dtype=jnp.float32)
    out2 = jax.block_until_ready(mlp_forward(x2, w1, b1, w2, b2))
    assert out2.shape == (B2,), out2.shape
    assert jnp.allclose(out2, reference(x2), atol=1e-5, rtol=1e-5)

    print("KERNEL_OK")
</pallas_src>

<mosaic_0001>
module attributes {stable_mosaic.version = 11 : i64} {
  func.func @mlp_kernel(%arg0: i32, %arg1: memref<1x104xf32, #tpu.memory_space<vmem>>, %arg2: memref<105x64xf32, #tpu.memory_space<vmem>>, %arg3: memref<65x8xf32, #tpu.memory_space<vmem>>, %arg4: memref<1x8xf32, #tpu.memory_space<vmem>>) attributes {dimension_semantics = [#tpu.dimension_semantics<parallel>], iteration_bounds = array<i64: 1>, scalar_prefetch = 0 : i64, scratch_operands = 0 : i64, tpu.core_type = #tpu.core_type<tc>, window_params = [{transform_indices = @transform_0, window_bounds = array<i64: 1, 104>}, {pipeline_mode = #tpu.pipeline_mode<synchronous>, transform_indices = @transform_1, window_bounds = array<i64: 105, 64>}, {pipeline_mode = #tpu.pipeline_mode<synchronous>, transform_indices = @transform_2, window_bounds = array<i64: 65, 8>}, {transform_indices = @transform_3, window_bounds = array<i64: 1, 8>}]} {
    %c0 = arith.constant 0 : index
    %c0_0 = arith.constant 0 : index
    %0 = vector.load %arg1[%c0, %c0_0] : memref<1x104xf32, #tpu.memory_space<vmem>>, vector<1x104xf32>
    %c0_1 = arith.constant 0 : index
    %c0_2 = arith.constant 0 : index
    %1 = vector.load %arg2[%c0_1, %c0_2] : memref<105x64xf32, #tpu.memory_space<vmem>>, vector<104x64xf32>
    %c104 = arith.constant 104 : index
    %c0_3 = arith.constant 0 : index
    %2 = vector.load %arg2[%c104, %c0_3] : memref<105x64xf32, #tpu.memory_space<vmem>>, vector<1x64xf32>
    %c0_4 = arith.constant 0 : index
    %c0_5 = arith.constant 0 : index
    %3 = vector.load %arg3[%c0_4, %c0_5] : memref<65x8xf32, #tpu.memory_space<vmem>>, vector<64x8xf32>
    %c64 = arith.constant 64 : index
    %c0_6 = arith.constant 0 : index
    %4 = vector.load %arg3[%c64, %c0_6] : memref<65x8xf32, #tpu.memory_space<vmem>>, vector<1x8xf32>
    %cst = arith.constant dense<0.000000e+00> : vector<1x64xf32>
    %5 = tpu.matmul %0, %1, %cst {dimension_numbers = #tpu.dot_dimension_numbers<[1], [0], [0], [1], [0, 0, 1, 1], [], []>} : vector<1x104xf32>, vector<104x64xf32>, vector<1x64xf32> -> vector<1x64xf32>
    %6 = arith.addf %5, %2 : vector<1x64xf32>
    %cst_7 = arith.constant 0.000000e+00 : f32
    %7 = vector.broadcast %cst_7 : f32 to vector<1x64xf32>
    %8 = arith.maximumf %6, %7 : vector<1x64xf32>
    %cst_8 = arith.constant dense<0.000000e+00> : vector<1x8xf32>
    %9 = tpu.matmul %8, %3, %cst_8 {dimension_numbers = #tpu.dot_dimension_numbers<[1], [0], [0], [1], [0, 0, 1, 1], [], []>} : vector<1x64xf32>, vector<64x8xf32>, vector<1x8xf32> -> vector<1x8xf32>
    %10 = arith.addf %9, %4 : vector<1x8xf32>
    %c0_9 = arith.constant 0 : index
    %c0_10 = arith.constant 0 : index
    %11 = vector.load %arg4[%c0_9, %c0_10] : memref<1x8xf32, #tpu.memory_space<vmem>>, vector<1x8xf32>
    tpu.vector_store %arg4[%c0_9, %c0_10], %10 {strides = array<i32>} : memref<1x8xf32, #tpu.memory_space<vmem>>, vector<1x8xf32>,
    return
  }
  func.func @transform_0(%arg0: i32) -> (i32, i32) {
    %c0_i32 = arith.constant 0 : i32
    %c0_i32_0 = arith.constant 0 : i32
    return %arg0, %c0_i32 : i32, i32
  }
  func.func @transform_1(%arg0: i32) -> (i32, i32) {
    %c0_i32 = arith.constant 0 : i32
    %c0_i32_0 = arith.constant 0 : i32
    %c0_i32_1 = arith.constant 0 : i32
    return %c0_i32, %c0_i32_0 : i32, i32
  }
  func.func @transform_2(%arg0: i32) -> (i32, i32) {
    %c0_i32 = arith.constant 0 : i32
    %c0_i32_0 = arith.constant 0 : i32
    %c0_i32_1 = arith.constant 0 : i32
    return %c0_i32, %c0_i32_0 : i32, i32
  }
  func.func @transform_3(%arg0: i32) -> (i32, i32) {
    %c0_i32 = arith.constant 0 : i32
    %c0_i32_0 = arith.constant 0 : i32
    return %arg0, %c0_i32 : i32, i32
  }
}

</mosaic_0001>

<llo_original>
// kernel: mlp_forward.1
$region0: #{mlp_forward.1}
  #allocation0 [shape = 'u32[]', space=smem, size = 0x4, offset = 0x4, fixed_abs, tag = 'smem constant byte address 0x4 - core index']
  #allocation1 [shape = 'u32[144,128]{1,0:T(1,128)}', space=vmem, size = 0x12000, scoped, tag = 'internal scratch']
  %s0 = inlined_call_operand.vmem [shape: f32[1,104], index: 0, kind: input, shape index: {}]
  %s1 = inlined_call_operand.vmem [shape: f32[105,64], index: 1, kind: input, shape index: {}]
  %s2 = inlined_call_operand.vmem [shape: f32[65,8], index: 2, kind: input, shape index: {}]
  %s3 = inlined_call_operand.hbm [shape: f32[1,8], index: 3, kind: output, shape index: {}]
  %s4 = sld [smem:[#allocation0]]
  $region22: #{mlp_forward.1} parent=0
    _
  %s6 = ssub.s32 1, %s4
  %s7 = scalar_select 0, %s6, %s4
  $region1: #{mlp_forward.1} parent=0
    #allocation2 [shape = 'u8[512]{0}', space=vmem, size = 0x400, scoped, tag = 'output window, operand 0, single buffered']
    #allocation3 [shape = 's32[1]{0}', space=sflag, size = 0x4, scoped, tag = 'scoped memory for mlp_forward.1']
    %8 = vsyncpa [#allocation3], 0
    // Predicated region
    $region2: #{mlp_forward.1} parent=1 // pred_check
      _
    $region3: #{mlp_forward.1} parent=1 // pred_check_branch
      %10 = sbr.rel (0) target = $region5
    $region4: #{mlp_forward.1} parent=1 // pred_region
      _
    $region5: #{mlp_forward.1} parent=1 // pred_fallthru
      _
    // Predicated region
    $region6: #{mlp_forward.1} parent=1 // pred_check
      _
    $region7: #{mlp_forward.1} parent=1 // pred_check_branch
      %12 = sbr.rel (0) target = $region9
    $region8: #{mlp_forward.1} parent=1 // pred_region
      _
    $region9: #{mlp_forward.1} parent=1 // pred_fallthru
      _
    // Predicated region
    $region10: #{mlp_forward.1} parent=1 // pred_check
      _
    $region11: #{mlp_forward.1} parent=1 // pred_check_branch
      %14 = sbr.rel (0) target = $region13
    $region12: #{mlp_forward.1} parent=1 // pred_region
      _
    $region13: #{mlp_forward.1} parent=1 // pred_fallthru
      _
    %v15 = vld [vmem:[%s0] sm:$0x1]
    %v16 = vld [vmem:[%s1] sm:$0xff]
    %v17 = vld [vmem:[%s1 + $0x8] sm:$0xff]
    %v18 = vld [vmem:[%s1 + $0x10] sm:$0xff]
    %v19 = vld [vmem:[%s1 + $0x18] sm:$0xff]
    %v20 = vld [vmem:[%s1 + $0x20] sm:$0xff]
    %v21 = vld [vmem:[%s1 + $0x28] sm:$0xff]
    %v22 = vld [vmem:[%s1 + $0x30] sm:$0xff]
    %v23 = vld [vmem:[%s1 + $0x38] sm:$0xff]
    %v24 = vld [vmem:[%s1 + $0x40] sm:$0xff]
    %v25 = vld [vmem:[%s1 + $0x48] sm:$0xff]
    %v26 = vld [vmem:[%s1 + $0x50] sm:$0xff]
    %v27 = vld [vmem:[%s1 + $0x58] sm:$0xff]
    %v28 = vld [vmem:[%s1 + $0x60] sm:$0xff]
    %v29 = vld [vmem:[%s1 + $0x68] sm:$0x1]
    %v30 = vld [vmem:[%s2] sm:$0xff]
    %v31 = vld [vmem:[%s2 + $0x8] sm:$0xff]
    %v32 = vld [vmem:[%s2 + $0x10] sm:$0xff]
    %v33 = vld [vmem:[%s2 + $0x18] sm:$0xff]
    %v34 = vld [vmem:[%s2 + $0x20] sm:$0xff]
    %v35 = vld [vmem:[%s2 + $0x28] sm:$0xff]
    %v36 = vld [vmem:[%s2 + $0x30] sm:$0xff]
    %v37 = vld [vmem:[%s2 + $0x38] sm:$0xff]
    %v38 = vld [vmem:[%s2 + $0x40] sm:$0x1]
    %vm39 = vcmask 850944
    %v41 = vsel %vm39, %v15, 0
    %43 = vmatprep.subr.mxu0 0.0
    %44 = vmatpush1.msra.mxu0 0.0
    %45 = vmatprep.subr.mxu0 0.0
    %46 = vmatpush1.msra.mxu0 0.0
    %47 = vmatprep.subr.mxu0 0.0
    %48 = vmatpush1.msra.mxu0 0.0
    %49 = vmatprep.subr.mxu0 0.0
    %50 = vmatpush1.msra.mxu0 %v28
    %51 = vmatprep.subr.mxu0 0.0
    %52 = vmatpush1.msra.mxu0 %v27
    %53 = vmatprep.subr.mxu0 0.0
    %54 = vmatpush1.msra.mxu0 %v26
    %55 = vmatprep.subr.mxu0 0.0
    %56 = vmatpush1.msra.mxu0 %v25
    %57 = vmatprep.subr.mxu0 0.0
    %58 = vmatpush1.msra.mxu0 %v24
    %59 = vmatprep.subr.mxu0 0.0
    %60 = vmatpush1.msra.mxu0 %v23
    %61 = vmatprep.subr.mxu0 0.0
    %62 = vmatpush1.msra.mxu0 %v22
    %63 = vmatprep.subr.mxu0 0.0
    %64 = vmatpush1.msra.mxu0 %v21
    %65 = vmatprep.subr.mxu0 0.0
    %66 = vmatpush1.msra.mxu0 %v20
    %67 = vmatprep.subr.mxu0 0.0
    %68 = vmatpush1.msra.mxu0 %v19
    %69 = vmatprep.subr.mxu0 0.0
    %70 = vmatpush1.msra.mxu0 %v18
    %71 = vmatprep.subr.mxu0 0.0
    %72 = vmatpush1.msra.mxu0 %v17
    %73 = vmatprep.subr.mxu0 0.0
    %74 = vmatpush1.msra.mxu0 %v16
    %75 = vmatprep.subr.mxu0 0.0
    %76 = vmatpush2.msra.mxu0 0.0
    %77 = vmatprep.subr.mxu0 0.0
    %78 = vmatpush2.msra.mxu0 0.0
    %79 = vmatprep.subr.mxu0 0.0
    %80 = vmatpush2.msra.mxu0 0.0
    %81 = vmatprep.subr.mxu0 0.0
    %82 = vmatpush2.msra.mxu0 0.0
    %83 = vmatprep.subr.mxu0 0.0
    %84 = vmatpush2.msra.mxu0 0.0
    %85 = vmatprep.subr.mxu0 0.0
    %86 = vmatpush2.msra.mxu0 0.0
    %87 = vmatprep.subr.mxu0 0.0
    %88 = vmatpush2.msra.mxu0 0.0
    %89 = vmatprep.subr.mxu0 0.0
    %90 = vmatpush2.msra.mxu0 0.0
    %91 = vmatprep.subr.mxu0 0.0
    %92 = vmatpush2.msra.mxu0 0.0
    %93 = vmatprep.subr.mxu0 0.0
    %94 = vmatpush2.msra.mxu0 0.0
    %95 = vmatprep.subr.mxu0 0.0
    %96 = vmatpush2.msra.mxu0 0.0
    %97 = vmatprep.subr.mxu0 0.0
    %98 = vmatpush2.msra.mxu0 0.0
    %99 = vmatprep.subr.mxu0 0.0
    %100 = vmatpush2.msra.mxu0 0.0
    %101 = vmatprep.subr.mxu0 0.0
    %102 = vmatpush2.msra.mxu0 0.0
    %103 = vmatprep.subr.mxu0 0.0
    %104 = vmatpush2.msra.mxu0 0.0
    %105 = vmatprep.subr.mxu0 0.0
    %106 = vmatpush2.msra.mxu0 0.0
    %107 = vmatprep.mubr.f32.mxu0 0.0
    %108 = vmatmul.mubr.f32.gmra.mxu0 %v41
    %v109 = vpop.f32.mrf.mxu0
    %v110 = vadd.f32 %v29, %v109
    %v111 = vpop.f32.mrf.mxu0
    %112 = vdwg.mxu0
    %v113 = vmax.f32 %v110, 0.0
    %vm114 = vcmask 523264
    %v116 = vsel %vm114, %v113, 0
    %118 = vmatprep.subr.mxu0 0.0
    %119 = vmatpush1.msra.mxu0 0.0
    %120 = vmatprep.subr.mxu0 0.0
    %121 = vmatpush1.msra.mxu0 0.0
    %122 = vmatprep.subr.mxu0 0.0
    %123 = vmatpush1.msra.mxu0 0.0
    %124 = vmatprep.subr.mxu0 0.0
    %125 = vmatpush1.msra.mxu0 0.0
    %126 = vmatprep.subr.mxu0 0.0
    %127 = vmatpush1.msra.mxu0 0.0
    %128 = vmatprep.subr.mxu0 0.0
    %129 = vmatpush1.msra.mxu0 0.0
    %130 = vmatprep.subr.mxu0 0.0
    %131 = vmatpush1.msra.mxu0 0.0
    %132 = vmatprep.subr.mxu0 0.0
    %133 = vmatpush1.msra.mxu0 0.0
    %134 = vmatprep.subr.mxu0 0.0
    %135 = vmatpush1.msra.mxu0 %v37
    %136 = vmatprep.subr.mxu0 0.0
    %137 = vmatpush1.msra.mxu0 %v36
    %138 = vmatprep.subr.mxu0 0.0
    %139 = vmatpush1.msra.mxu0 %v35
    %140 = vmatprep.subr.mxu0 0.0
    %141 = vmatpush1.msra.mxu0 %v34
    %142 = vmatprep.subr.mxu0 0.0
    %143 = vmatpush1.msra.mxu0 %v33
    %144 = vmatprep.subr.mxu0 0.0
    %145 = vmatpush1.msra.mxu0 %v32
    %146 = vmatprep.subr.mxu0 0.0
    %147 = vmatpush1.msra.mxu0 %v31
    %148 = vmatprep.subr.mxu0 0.0
    %149 = vmatpush1.msra.mxu0 %v30
    %150 = vmatprep.subr.mxu0 0.0
    %151 = vmatpush2.msra.mxu0 0.0
    %152 = vmatprep.subr.mxu0 0.0
    %153 = vmatpush2.msra.mxu0 0.0
    %154 = vmatprep.subr.mxu0 0.0
    %155 = vmatpush2.msra.mxu0 0.0
    %156 = vmatprep.subr.mxu0 0.0
    %157 = vmatpush2.msra.mxu0 0.0
    %158 = vmatprep.subr.mxu0 0.0
    %159 = vmatpush2.msra.mxu0 0.0
    %160 = vmatprep.subr.mxu0 0.0
    %161 = vmatpush2.msra.mxu0 0.0
    %162 = vmatprep.subr.mxu0 0.0
    %163 = vmatpush2.msra.mxu0 0.0
    %164 = vmatprep.subr.mxu0 0.0
    %165 = vmatpush2.msra.mxu0 0.0
    %166 = vmatprep.subr.mxu0 0.0
    %167 = vmatpush2.msra.mxu0 0.0
    %168 = vmatprep.subr.mxu0 0.0
    %169 = vmatpush2.msra.mxu0 0.0
    %170 = vmatprep.subr.mxu0 0.0
    %171 = vmatpush2.msra.mxu0 0.0
    %172 = vmatprep.subr.mxu0 0.0
    %173 = vmatpush2.msra.mxu0 0.0
    %174 = vmatprep.subr.mxu0 0.0
    %175 = vmatpush2.msra.mxu0 0.0
    %176 = vmatprep.subr.mxu0 0.0
    %177 = vmatpush2.msra.mxu0 0.0
    %178 = vmatprep.subr.mxu0 0.0
    %179 = vmatpush2.msra.mxu0 0.0
    %180 = vmatprep.subr.mxu0 0.0
    %181 = vmatpush2.msra.mxu0 0.0
    %182 = vmatprep.mubr.f32.mxu0 0.0
    %183 = vmatmul.mubr.f32.gmra.mxu0 %v116
    %v184 = vpop.f32.mrf.mxu0
    %v185 = vadd.f32 %v38, %v184
    %v186 = vpop.f32.mrf.mxu0
    %187 = vdwg.mxu0
    %vm188 = vcmask 57344
    %189 = vst.msk [vmem:[#allocation2] sm:$0x1] %vm188, %v185
    // Predicated region
    $region14: #{mlp_forward.1} parent=1 // pred_check
      _
    $region15: #{mlp_forward.1} parent=1 // pred_check_branch
      %191 = sbr.rel (0) target = $region17
    $region16: #{mlp_forward.1} parent=1 // pred_region
      %s193 = ssub.s32 16, 16
      %194 = vsyncadd [#allocation3], %s193
      %s196 = sshll.u32 [#allocation2], 4
      %s197 = int_to_ptr.vmem [resolvable:$true] %s196
      %199 = dma.vmem_to_hbm [thread:$0]  %s197, 16, %s3, [#allocation3]
    $region17: #{mlp_forward.1} parent=1 // pred_fallthru
      _
    // Predicated region
    $region18: #{mlp_forward.1} parent=1 // pred_check
      _
    $region19: #{mlp_forward.1} parent=1 // pred_check_branch
      %201 = sbr.rel (0) target = $region21
    $region20: #{mlp_forward.1} parent=1 // pred_region
      %202 = dma.done [#allocation3], 16
    $region21: #{mlp_forward.1} parent=1 // pred_fallthru
      _
    %203 = vsyncpa [#allocation3], 1

</llo_original>
